<compile_context>
chip_gen: v7x
topology: tpu7x:2x2x1
jax: 0.10.0
libtpu: 0.0.40
codegen_flags: <defaults>
</compile_context>

<pallas_src>
import functools
import math

import numpy as np
import jax
import jax.numpy as jnp
from jax import lax
from jax.experimental import pallas as pl
from jax.experimental.pallas import tpu as pltpu


# ----------------------------------------------------------------------------
# Host-side P-matrix computation (exact port of the module's numpy code).
# The original module explicitly moves input_features to CPU/numpy for this.
# ----------------------------------------------------------------------------
def _hbeta(D, beta):
    P = np.exp(-D * beta)
    sumP = np.sum(P)
    H = np.log(sumP) + beta * np.sum(np.multiply(D, P)) / sumP
    P = P / sumP
    return H, P


def _x2p(X, u=15, tol=1e-4, max_tries=50):
    n = X.shape[0]
    P = np.zeros((n, n))
    beta = np.ones(n) * 0.01
    logU = np.log(u)
    sum_X = np.sum(np.square(X), axis=1)
    D = sum_X + sum_X[:, None] + -2 * X.dot(X.T)
    for i in range(n):
        betamin = float('-inf')
        betamax = float('+inf')
        indices = np.concatenate((np.arange(0, i), np.arange(i + 1, n)))
        Di = D[i, indices]
        H, thisP = _hbeta(Di, beta[i])
        Hdiff = H - logU
        tries = 0
        while abs(Hdiff) > tol and tries < max_tries:
            if Hdiff > 0:
                betamin = beta[i]
                beta[i] = beta[i] * 2 if np.isinf(betamax) else (beta[i] + betamax) / 2
            else:
                betamax = beta[i]
                beta[i] = beta[i] / 2 if np.isinf(betamin) else (beta[i] + betamin) / 2
            H, thisP = _hbeta(Di, beta[i])
            Hdiff = H - logU
            tries += 1
        P[i, indices] = thisP
    return P, beta


def compute_joint_probabilities(features, perplexity=30, tol=1e-5):
    P, _ = _x2p(features, perplexity, tol)
    P[np.isnan(P)] = 0
    P = P + P.T
    P = P / P.sum()
    P = np.maximum(P, np.finfo(P.dtype).eps)
    return P


# ----------------------------------------------------------------------------
# Pallas kernel: streaming t-SNE loss over row tiles of P/Q.
# ----------------------------------------------------------------------------
def _tsne_loss_kernel(p_ref, a_blk_ref, a_all_ref, sq_ref, out_ref,
                      acc_s, acc_a, acc_b, acc_d,
                      *, n, tm, dof, alpha, reduction):
    eps = 1e-15
    i = pl.program_id(0)
    nt = pl.num_programs(0)

    @pl.when(i == 0)
    def _init():
        acc_s[...] = jnp.zeros_like(acc_s)
        acc_a[...] = jnp.zeros_like(acc_a)
        acc_b[...] = jnp.zeros_like(acc_b)
        acc_d[...] = jnp.zeros_like(acc_d)
        out_ref[...] = jnp.zeros_like(out_ref)

    P = p_ref[...].astype(jnp.float32)          # (tm, n)
    A_blk = a_blk_ref[...].astype(jnp.float32)  # (tm, d)
    A_all = a_all_ref[...].astype(jnp.float32)  # (n, d)  resident
    sq_cols = sq_ref[...]                       # (1, n)  resident

    # Pairwise squared distances for this row block (no transpose: contract
    # last dims of both operands on the MXU).
    sq_rows = jnp.sum(A_blk * A_blk, axis=1, keepdims=True)            # (tm, 1)
    G = lax.dot_general(A_blk, A_all,
                        dimension_numbers=(((1,), (1,)), ((), ())),
                        preferred_element_type=jnp.float32)            # (tm, n)
    dist = jnp.maximum(sq_rows + sq_cols - 2.0 * G, 0.0)
    if float(dof) != 1.0:
        dist = dist / float(dof)

    expo = -(float(dof) + 1.0) / 2.0
    dof_is_one = (expo == -1.0)

    log_qhat = None
    if dof_is_one:
        qhat = 1.0 / (1.0 + dist)                       # Student-t, dof=1
    else:
        log_qhat = expo * jnp.log1p(dist)               # reuse as log(Qhat)
        qhat = jnp.exp(log_qhat)

    if alpha == 1:
        # Hot (default) path: mask-free streaming accumulation.
        #  - diagonal of Qhat is ~1 per row -> subtract tm from the S acc.
        #  - diagonal divergence terms are O(P_ii)=O(2e-16): negligible.
        acc_s[...] += jnp.sum(qhat) - float(tm)
        if dof_is_one:
            # log(P+eps) - log(Qhat) fused into a single EUP log.
            log_ratio = jnp.log((P + eps) * (1.0 + dist))
        else:
            log_ratio = jnp.log(P + eps) - log_qhat
        acc_a[...] += jnp.sum(P * log_ratio)
        acc_b[...] += jnp.sum(P)
    else:
        # Non-default branches: exact diagonal handling with a per-tile mask.
        row = lax.broadcasted_iota(jnp.int32, (tm, n), 0) + i * tm
        col = lax.broadcasted_iota(jnp.int32, (tm, n), 1)
        is_diag = row == col
        acc_s[...] += jnp.sum(jnp.where(is_diag, 0.0, qhat))
        if alpha == 0:
            lq = -jnp.log1p(dist) if dof_is_one else log_qhat
            acc_a[...] += jnp.sum(jnp.where(is_diag, 0.0, -lq))
        elif alpha == 0.5:
            f = jnp.sqrt((P + eps) * qhat)
            g = jnp.sqrt((P + eps) * eps)
            acc_a[...] += jnp.sum(jnp.where(is_diag, 0.0, f))
            acc_d[...] += jnp.sum(jnp.where(is_diag, g, 0.0))
        elif alpha == 2:
            f = (P + eps) / qhat
            g = (P + eps) / eps
            acc_a[...] += jnp.sum(jnp.where(is_diag, 0.0, f))
            acc_d[...] += jnp.sum(jnp.where(is_diag, g, 0.0))
        else:
            num = jnp.power(P + eps, float(alpha))
            f = num / jnp.power(qhat, float(alpha) - 1.0)
            g = num / (eps ** (float(alpha) - 1.0))
            acc_a[...] += jnp.sum(jnp.where(is_diag, 0.0, f))
            acc_d[...] += jnp.sum(jnp.where(is_diag, g, 0.0))

    @pl.when(i == nt - 1)
    def _finalize():
        nn = float(n) * float(n)
        S = acc_s[...]            # sum of Qhat over off-diagonal = normalizer
        a1 = acc_a[...]
        if alpha == 0:
            csum = a1 + (nn - float(n)) * jnp.log(S) + float(n) * (-math.log(eps))
            val = csum if reduction == 'sum' else csum / nn
        elif alpha == 0.5:
            T = a1 / jnp.sqrt(S) + acc_d[...]
            red = T if reduction == 'sum' else T / nn
            val = -2.0 * jnp.log(red)
        elif alpha == 1:
            csum = a1 + jnp.log(S) * acc_b[...]
            val = csum if reduction == 'sum' else csum / nn
        elif alpha == 2:
            # torch.sum / torch.mean of a scalar is the scalar itself.
            val = jnp.log((S * a1 + acc_d[...]) / nn)
        else:
            T = jnp.power(S, float(alpha) - 1.0) * a1 + acc_d[...]
            red = T if reduction == 'sum' else T / nn
            val = (1.0 / (float(alpha) - 1.0)) * jnp.log(red)
        out_ref[...] = val.astype(jnp.float32)


def _pick_block_rows(n):
    # Keep each (tm, n) f32 slab around <= 1 MiB; tm a multiple of 8 dividing n.
    cap = max(8, (1 << 20) // max(4 * n, 1))
    for cand in (512, 256, 128, 64, 32, 16, 8):
        if cand <= cap and n % cand == 0:
            return cand
    return n  # fall back: a single full tile (satisfies the full-dim rule)


def tsne_loss_pallas(P, activations, *, dof=1, alpha=1, reduction='mean',
                     block_rows=None):
    """P: (n, n) joint probabilities, activations: (n, d) embedding."""
    n, d = activations.shape
    assert P.shape == (n, n)

    tm = _pick_block_rows(n) if block_rows is None else int(block_rows)
    assert n % tm == 0 and (tm == n or tm % 8 == 0), (n, tm)
    nt = n // tm

    P32 = P.astype(jnp.float32)
    A32 = activations.astype(jnp.float32)
    sq = jnp.sum(A32 * A32, axis=1).reshape(1, n).astype(jnp.float32)

    # VMEM budget: double-buffered P/A row blocks + resident A/norms + in-flight
    # intermediates; keep under v7x's 64 MiB physical VMEM.
    need_bytes = 4 * (2 * tm * n + 2 * tm * d + n * d + n + 8 * tm * n)
    vmem_limit = int(min(max(2 * need_bytes, 32 * 1024 * 1024),
                         56 * 1024 * 1024))

    kernel = functools.partial(
        _tsne_loss_kernel, n=n, tm=tm, dof=dof, alpha=alpha, reduction=reduction)

    grid_spec = pltpu.PrefetchScalarGridSpec(
        num_scalar_prefetch=0,
        grid=(nt,),
        in_specs=[
            pl.BlockSpec((tm, n), lambda i: (i, 0)),   # P row block (streamed)
            pl.BlockSpec((tm, d), lambda i: (i, 0)),   # embedding row block
            pl.BlockSpec((n, d), lambda i: (0, 0)),    # embedding, resident
            pl.BlockSpec((1, n), lambda i: (0, 0)),    # column squared norms
        ],
        out_specs=pl.BlockSpec((1, 1), lambda i: (0, 0)),
        scratch_shapes=[pltpu.VMEM((1, 1), jnp.float32)] * 4,
    )

    out = pl.pallas_call(
        kernel,
        out_shape=jax.ShapeDtypeStruct((1, 1), jnp.float32),
        grid_spec=grid_spec,
        compiler_params=pltpu.CompilerParams(
            dimension_semantics=("arbitrary",),      # reduction over row tiles
            vmem_limit_bytes=vmem_limit),
        cost_estimate=pl.CostEstimate(
            flops=2 * n * n * d + 10 * n * n,
            transcendentals=3 * n * n,
            bytes_accessed=4 * (n * n + 2 * n * d + 2 * n)),
    )(P32, A32, A32, sq)
    return out[0, 0]


# ----------------------------------------------------------------------------
# TSNE_Loss module equivalent (forward only).
# ----------------------------------------------------------------------------
class TSNELossPallas:
    def __init__(self, reduction='mean', dof=1, alpha=1, perplexity=30,
                 loss_metric='Renyi'):
        self.reduction = reduction
        self.dof = dof
        self.alpha = alpha
        self.perplexity = perplexity
        self.loss_metric = loss_metric

    def __call__(self, input_features, embedding, block_rows=None):
        # Host-side P-matrix (the reference module does the same on CPU).
        P_np = compute_joint_probabilities(
            np.asarray(jax.device_get(input_features), dtype=np.float64),
            perplexity=self.perplexity)
        P = jnp.asarray(P_np, dtype=jnp.float32)
        if self.loss_metric == 'EMD':
            # TODO(synk): geomloss.SamplesLoss('sinkhorn') has no Pallas equivalent.
            raise NotImplementedError("EMD / sinkhorn loss not implemented")
        return tsne_loss_pallas(P, embedding, dof=self.dof, alpha=self.alpha,
                                reduction=self.reduction, block_rows=block_rows)


# ----------------------------------------------------------------------------
# Pure-JAX reference (faithful to the torch tsne_loss) for correctness checks.
# ----------------------------------------------------------------------------
def _tsne_loss_ref(P, A, dof=1, alpha=1, reduction='mean'):
    eps = 1e-15
    n = A.shape[0]
    sum_act = jnp.sum(A * A, axis=1)
    Q = sum_act[None, :] + sum_act[:, None] - 2.0 * (A @ A.T)
    Q = Q / dof
    Q = jnp.power(1.0 + Q, -(dof + 1) / 2)
    Q = Q * (1.0 - jnp.eye(n, dtype=Q.dtype))
    Q = Q / jnp.sum(Q)
    if alpha == 0:
        C = -jnp.log(Q + eps)          # P > 0 everywhere after the eps clamp
        return jnp.sum(C) if reduction == 'sum' else jnp.mean(C)
    elif alpha == 0.5:
        C = jnp.sqrt((P + eps) * (Q + eps))
        red = jnp.sum(C) if reduction == 'sum' else jnp.mean(C)
        return -2.0 * jnp.log(red)
    elif alpha == 1:
        C = jnp.log((P + eps) / (Q + eps))
        return jnp.sum(P * C) if reduction == 'sum' else jnp.mean(P * C)
    elif alpha == 2:
        return jnp.log(jnp.mean((P + eps) / (Q + eps)))
    else:
        C = jnp.power(P + eps, alpha) / jnp.power(Q + eps, alpha - 1.0)
        red = jnp.sum(C) if reduction == 'sum' else jnp.mean(C)
        return (1.0 / (alpha - 1.0)) * jnp.log(red)


if __name__ == "__main__":
    key = jax.random.PRNGKey(0)
    k1, k2 = jax.random.split(key)

    n, feat_dim, emb_dim = 64, 32, 8
    input_features = jax.random.normal(k1, (n, feat_dim), dtype=jnp.float32)
    embedding = jax.random.normal(k2, (n, emb_dim), dtype=jnp.float32)

    # Module forward (defaults: dof=1, alpha=1, mean), auto tile size.
    loss_mod = TSNELossPallas(reduction='mean', dof=1, alpha=1, perplexity=30)
    loss = jax.block_until_ready(loss_mod(input_features, embedding))

    # Correctness checks against the pure-JAX reference, exercising the
    # multi-tile streaming path (block_rows=16 -> grid of 4 row tiles).
    P_np = compute_joint_probabilities(
        np.asarray(jax.device_get(input_features), dtype=np.float64),
        perplexity=30)
    P = jnp.asarray(P_np, jnp.float32)

    ref_mod = _tsne_loss_ref(P, embedding, dof=1, alpha=1, reduction='mean')
    np.testing.assert_allclose(np.asarray(loss), np.asarray(ref_mod),
                               rtol=1e-4, atol=1e-6)

    for alpha, reduction in [(1, 'mean'), (1, 'sum'), (0, 'mean')]:
        got = jax.block_until_ready(
            tsne_loss_pallas(P, embedding, dof=1, alpha=alpha,
                             reduction=reduction, block_rows=16))
        ref = _tsne_loss_ref(P, embedding, dof=1, alpha=alpha,
                             reduction=reduction)
        np.testing.assert_allclose(np.asarray(got), np.asarray(ref),
                                   rtol=1e-4, atol=1e-6)

    print("KERNEL_OK")
</pallas_src>

<mosaic_0001>
module attributes {stable_mosaic.version = 11 : i64} {
  func.func @_tsne_loss_kernel(%arg0: i32, %arg1: memref<64x64xf32, #tpu.memory_space<vmem>>, %arg2: memref<64x8xf32, #tpu.memory_space<vmem>>, %arg3: memref<64x8xf32, #tpu.memory_space<vmem>>, %arg4: memref<1x64xf32, #tpu.memory_space<vmem>>, %arg5: memref<1x1xf32, #tpu.memory_space<vmem>>, %arg6: memref<1x1xf32, #tpu.memory_space<vmem>>, %arg7: memref<1x1xf32, #tpu.memory_space<vmem>>, %arg8: memref<1x1xf32, #tpu.memory_space<vmem>>, %arg9: memref<1x1xf32, #tpu.memory_space<vmem>>) attributes {dimension_semantics = [#tpu.dimension_semantics<arbitrary>], iteration_bounds = array<i64: 1>, scalar_prefetch = 0 : i64, scratch_operands = 4 : i64, tpu.core_type = #tpu.core_type<tc>, window_params = [{transform_indices = @transform_0, window_bounds = array<i64: 64, 64>}, {transform_indices = @transform_1, window_bounds = array<i64: 64, 8>}, {pipeline_mode = #tpu.pipeline_mode<synchronous>, transform_indices = @transform_2, window_bounds = array<i64: 64, 8>}, {pipeline_mode = #tpu.pipeline_mode<synchronous>, transform_indices = @transform_3, window_bounds = array<i64: 1, 64>}, {pipeline_mode = #tpu.pipeline_mode<synchronous>, transform_indices = @transform_4, window_bounds = array<i64: 1, 1>}]} {
    %c0_i32 = arith.constant 0 : i32
    %0 = arith.cmpi eq, %arg0, %c0_i32 : i32
    %1 = arith.extui %0 : i1 to i32
    %c0_i32_0 = arith.constant 0 : i32
    %2 = arith.cmpi ne, %1, %c0_i32_0 : i32
    scf.if %2 {
      %cst_33 = arith.constant 0.000000e+00 : f32
      %58 = vector.broadcast %cst_33 : f32 to vector<1x1xf32>
      %c0_34 = arith.constant 0 : index
      %c0_35 = arith.constant 0 : index
      %59 = vector.load %arg6[%c0_34, %c0_35] : memref<1x1xf32, #tpu.memory_space<vmem>>, vector<1x1xf32>
      tpu.vector_store %arg6[%c0_34, %c0_35], %58 {strides = array<i32>} : memref<1x1xf32, #tpu.memory_space<vmem>>, vector<1x1xf32>,
      %cst_36 = arith.constant 0.000000e+00 : f32
      %60 = vector.broadcast %cst_36 : f32 to vector<1x1xf32>
      %c0_37 = arith.constant 0 : index
      %c0_38 = arith.constant 0 : index
      %61 = vector.load %arg7[%c0_37, %c0_38] : memref<1x1xf32, #tpu.memory_space<vmem>>, vector<1x1xf32>
      tpu.vector_store %arg7[%c0_37, %c0_38], %60 {strides = array<i32>} : memref<1x1xf32, #tpu.memory_space<vmem>>, vector<1x1xf32>,
      %cst_39 = arith.constant 0.000000e+00 : f32
      %62 = vector.broadcast %cst_39 : f32 to vector<1x1xf32>
      %c0_40 = arith.constant 0 : index
      %c0_41 = arith.constant 0 : index
      %63 = vector.load %arg8[%c0_40, %c0_41] : memref<1x1xf32, #tpu.memory_space<vmem>>, vector<1x1xf32>
      tpu.vector_store %arg8[%c0_40, %c0_41], %62 {strides = array<i32>} : memref<1x1xf32, #tpu.memory_space<vmem>>, vector<1x1xf32>,
      %cst_42 = arith.constant 0.000000e+00 : f32
      %64 = vector.broadcast %cst_42 : f32 to vector<1x1xf32>
      %c0_43 = arith.constant 0 : index
      %c0_44 = arith.constant 0 : index
      %65 = vector.load %arg9[%c0_43, %c0_44] : memref<1x1xf32, #tpu.memory_space<vmem>>, vector<1x1xf32>
      tpu.vector_store %arg9[%c0_43, %c0_44], %64 {strides = array<i32>} : memref<1x1xf32, #tpu.memory_space<vmem>>, vector<1x1xf32>,
      %cst_45 = arith.constant 0.000000e+00 : f32
      %66 = vector.broadcast %cst_45 : f32 to vector<1x1xf32>
      %c0_46 = arith.constant 0 : index
      %c0_47 = arith.constant 0 : index
      %67 = vector.load %arg5[%c0_46, %c0_47] : memref<1x1xf32, #tpu.memory_space<vmem>>, vector<1x1xf32>
      tpu.vector_store %arg5[%c0_46, %c0_47], %66 {strides = array<i32>} : memref<1x1xf32, #tpu.memory_space<vmem>>, vector<1x1xf32>,
    } else {
    }
    %c0 = arith.constant 0 : index
    %c0_1 = arith.constant 0 : index
    %3 = vector.load %arg1[%c0, %c0_1] : memref<64x64xf32, #tpu.memory_space<vmem>>, vector<64x64xf32>
    %c0_2 = arith.constant 0 : index
    %c0_3 = arith.constant 0 : index
    %4 = vector.load %arg2[%c0_2, %c0_3] : memref<64x8xf32, #tpu.memory_space<vmem>>, vector<64x8xf32>
    %c0_4 = arith.constant 0 : index
    %c0_5 = arith.constant 0 : index
    %5 = vector.load %arg3[%c0_4, %c0_5] : memref<64x8xf32, #tpu.memory_space<vmem>>, vector<64x8xf32>
    %c0_6 = arith.constant 0 : index
    %c0_7 = arith.constant 0 : index
    %6 = vector.load %arg4[%c0_6, %c0_7] : memref<1x64xf32, #tpu.memory_space<vmem>>, vector<1x64xf32>
    %7 = arith.mulf %4, %4 : vector<64x8xf32>
    %cst = arith.constant dense<0.000000e+00> : vector<64xf32>
    %8 = vector.multi_reduction <add>, %7, %cst [1] : vector<64x8xf32> to vector<64xf32>
    %9 = vector.shape_cast %8 : vector<64xf32> to vector<64x1xf32>
    %cst_8 = arith.constant dense<0.000000e+00> : vector<64x64xf32>
    %10 = tpu.matmul %4, %5, %cst_8 {dimension_numbers = #tpu.dot_dimension_numbers<[1], [1], [0], [0], [0, 0, 1, 0], [], []>} : vector<64x8xf32>, vector<64x8xf32>, vector<64x64xf32> -> vector<64x64xf32>
    %11 = vector.broadcast %9 : vector<64x1xf32> to vector<64x64xf32>
    %12 = vector.broadcast %6 : vector<1x64xf32> to vector<64x64xf32>
    %13 = arith.addf %11, %12 : vector<64x64xf32>
    %cst_9 = arith.constant 2.000000e+00 : f32
    %14 = vector.broadcast %cst_9 : f32 to vector<64x64xf32>
    %15 = arith.mulf %14, %10 : vector<64x64xf32>
    %16 = arith.subf %13, %15 : vector<64x64xf32>
    %cst_10 = arith.constant 0.000000e+00 : f32
    %17 = vector.broadcast %cst_10 : f32 to vector<64x64xf32>
    %18 = arith.maximumf %16, %17 : vector<64x64xf32>
    %cst_11 = arith.constant 1.000000e+00 : f32
    %19 = vector.broadcast %cst_11 : f32 to vector<64x64xf32>
    %20 = arith.addf %19, %18 : vector<64x64xf32>
    %cst_12 = arith.constant 1.000000e+00 : f32
    %21 = vector.broadcast %cst_12 : f32 to vector<64x64xf32>
    %22 = arith.divf %21, %20 : vector<64x64xf32>
    %c0_13 = arith.constant 0 : index
    %c0_14 = arith.constant 0 : index
    %23 = vector.load %arg6[%c0_13, %c0_14] : memref<1x1xf32, #tpu.memory_space<vmem>>, vector<1x1xf32>
    %24 = vector.shape_cast %22 : vector<64x64xf32> to vector<1x64x64xf32>
    %cst_15 = arith.constant dense<0.000000e+00> : vector<1xf32>
    %25 = vector.multi_reduction <add>, %24, %cst_15 [1, 2] : vector<1x64x64xf32> to vector<1xf32>
    %26 = vector.shape_cast %25 : vector<1xf32> to vector<1x1x1xf32>
    %27 = vector.extract %26[0, 0, 0] : f32 from vector<1x1x1xf32>
    %cst_16 = arith.constant 6.400000e+01 : f32
    %28 = arith.subf %27, %cst_16 : f32
    %29 = vector.broadcast %28 : f32 to vector<1x1xf32>
    %30 = arith.addf %23, %29 : vector<1x1xf32>
    %c0_17 = arith.constant 0 : index
    %c0_18 = arith.constant 0 : index
    %31 = vector.load %arg6[%c0_17, %c0_18] : memref<1x1xf32, #tpu.memory_space<vmem>>, vector<1x1xf32>
    tpu.vector_store %arg6[%c0_17, %c0_18], %30 {strides = array<i32>} : memref<1x1xf32, #tpu.memory_space<vmem>>, vector<1x1xf32>,
    %cst_19 = arith.constant 1.000000e-15 : f32
    %32 = vector.broadcast %cst_19 : f32 to vector<64x64xf32>
    %33 = arith.addf %3, %32 : vector<64x64xf32>
    %cst_20 = arith.constant 1.000000e+00 : f32
    %34 = vector.broadcast %cst_20 : f32 to vector<64x64xf32>
    %35 = arith.addf %34, %18 : vector<64x64xf32>
    %36 = arith.mulf %33, %35 : vector<64x64xf32>
    %37 = math.log %36 : vector<64x64xf32>
    %c0_21 = arith.constant 0 : index
    %c0_22 = arith.constant 0 : index
    %38 = vector.load %arg7[%c0_21, %c0_22] : memref<1x1xf32, #tpu.memory_space<vmem>>, vector<1x1xf32>
    %39 = arith.mulf %3, %37 : vector<64x64xf32>
    %40 = vector.shape_cast %39 : vector<64x64xf32> to vector<1x64x64xf32>
    %cst_23 = arith.constant dense<0.000000e+00> : vector<1xf32>
    %41 = vector.multi_reduction <add>, %40, %cst_23 [1, 2] : vector<1x64x64xf32> to vector<1xf32>
    %42 = vector.shape_cast %41 : vector<1xf32> to vector<1x1x1xf32>
    %43 = vector.extract %42[0, 0, 0] : f32 from vector<1x1x1xf32>
    %44 = vector.broadcast %43 : f32 to vector<1x1xf32>
    %45 = arith.addf %38, %44 : vector<1x1xf32>
    %c0_24 = arith.constant 0 : index
    %c0_25 = arith.constant 0 : index
    %46 = vector.load %arg7[%c0_24, %c0_25] : memref<1x1xf32, #tpu.memory_space<vmem>>, vector<1x1xf32>
    tpu.vector_store %arg7[%c0_24, %c0_25], %45 {strides = array<i32>} : memref<1x1xf32, #tpu.memory_space<vmem>>, vector<1x1xf32>,
    %c0_26 = arith.constant 0 : index
    %c0_27 = arith.constant 0 : index
    %47 = vector.load %arg8[%c0_26, %c0_27] : memref<1x1xf32, #tpu.memory_space<vmem>>, vector<1x1xf32>
    %48 = vector.shape_cast %3 : vector<64x64xf32> to vector<1x64x64xf32>
    %cst_28 = arith.constant dense<0.000000e+00> : vector<1xf32>
    %49 = vector.multi_reduction <add>, %48, %cst_28 [1, 2] : vector<1x64x64xf32> to vector<1xf32>
    %50 = vector.shape_cast %49 : vector<1xf32> to vector<1x1x1xf32>
    %51 = vector.extract %50[0, 0, 0] : f32 from vector<1x1x1xf32>
    %52 = vector.broadcast %51 : f32 to vector<1x1xf32>
    %53 = arith.addf %47, %52 : vector<1x1xf32>
    %c0_29 = arith.constant 0 : index
    %c0_30 = arith.constant 0 : index
    %54 = vector.load %arg8[%c0_29, %c0_30] : memref<1x1xf32, #tpu.memory_space<vmem>>, vector<1x1xf32>
    tpu.vector_store %arg8[%c0_29, %c0_30], %53 {strides = array<i32>} : memref<1x1xf32, #tpu.memory_space<vmem>>, vector<1x1xf32>,
    %c0_i32_31 = arith.constant 0 : i32
    %55 = arith.cmpi eq, %arg0, %c0_i32_31 : i32
    %56 = arith.extui %55 : i1 to i32
    %c0_i32_32 = arith.constant 0 : i32
    %57 = arith.cmpi ne, %56, %c0_i32_32 : i32
    scf.if %57 {
      %c0_33 = arith.constant 0 : index
      %c0_34 = arith.constant 0 : index
      %58 = vector.load %arg6[%c0_33, %c0_34] : memref<1x1xf32, #tpu.memory_space<vmem>>, vector<1x1xf32>
      %c0_35 = arith.constant 0 : index
      %c0_36 = arith.constant 0 : index
      %59 = vector.load %arg7[%c0_35, %c0_36] : memref<1x1xf32, #tpu.memory_space<vmem>>, vector<1x1xf32>
      %60 = math.log %58 : vector<1x1xf32>
      %c0_37 = arith.constant 0 : index
      %c0_38 = arith.constant 0 : index
      %61 = vector.load %arg8[%c0_37, %c0_38] : memref<1x1xf32, #tpu.memory_space<vmem>>, vector<1x1xf32>
      %62 = arith.mulf %60, %61 : vector<1x1xf32>
      %63 = arith.addf %59, %62 : vector<1x1xf32>
      %cst_39 = arith.constant 4.096000e+03 : f32
      %64 = vector.broadcast %cst_39 : f32 to vector<1x1xf32>
      %65 = arith.divf %63, %64 : vector<1x1xf32>
      %c0_40 = arith.constant 0 : index
      %c0_41 = arith.constant 0 : index
      %66 = vector.load %arg5[%c0_40, %c0_41] : memref<1x1xf32, #tpu.memory_space<vmem>>, vector<1x1xf32>
      tpu.vector_store %arg5[%c0_40, %c0_41], %65 {strides = array<i32>} : memref<1x1xf32, #tpu.memory_space<vmem>>, vector<1x1xf32>,
    } else {
    }
    return
  }
  func.func @transform_0(%arg0: i32) -> (i32, i32) {
    %c0_i32 = arith.constant 0 : i32
    %c0_i32_0 = arith.constant 0 : i32
    return %arg0, %c0_i32 : i32, i32
  }
  func.func @transform_1(%arg0: i32) -> (i32, i32) {
    %c0_i32 = arith.constant 0 : i32
    %c0_i32_0 = arith.constant 0 : i32
    return %arg0, %c0_i32 : i32, i32
  }
  func.func @transform_2(%arg0: i32) -> (i32, i32) {
    %c0_i32 = arith.constant 0 : i32
    %c0_i32_0 = arith.constant 0 : i32
    %c0_i32_1 = arith.constant 0 : i32
    return %c0_i32, %c0_i32_0 : i32, i32
  }
  func.func @transform_3(%arg0: i32) -> (i32, i32) {
    %c0_i32 = arith.constant 0 : i32
    %c0_i32_0 = arith.constant 0 : i32
    %c0_i32_1 = arith.constant 0 : i32
    return %c0_i32, %c0_i32_0 : i32, i32
  }
  func.func @transform_4(%arg0: i32) -> (i32, i32) {
    %c0_i32 = arith.constant 0 : i32
    %c0_i32_0 = arith.constant 0 : i32
    %c0_i32_1 = arith.constant 0 : i32
    return %c0_i32, %c0_i32_0 : i32, i32
  }
}

</mosaic_0001>

<llo_original>
// kernel: tpu_custom_call.1
$region0: #{tpu_custom_call.1}
  #allocation0 [shape = 'u32[]', space=smem, size = 0x4, offset = 0x4, fixed_abs, tag = 'smem constant byte address 0x4 - core index']
  #allocation1 [shape = 'u32[144,128]{1,0:T(1,128)}', space=vmem, size = 0x12000, scoped, tag = 'internal scratch']
  #allocation2 [shape = 'f32[1,1]{1,0:T(1,128)}', space=vmem, size = 0x200, scoped, tag = 'scratch operand']
  #allocation3 [shape = 'f32[1,1]{1,0:T(1,128)}', space=vmem, size = 0x200, scoped, tag = 'scratch operand']
  #allocation4 [shape = 'f32[1,1]{1,0:T(1,128)}', space=vmem, size = 0x200, scoped, tag = 'scratch operand']
  #allocation5 [shape = 'f32[1,1]{1,0:T(1,128)}', space=vmem, size = 0x200, scoped, tag = 'scratch operand']
  %s0 = inlined_call_operand.vmem [shape: f32[64,64], index: 0, kind: input, shape index: {}]
  %s1 = inlined_call_operand.vmem [shape: f32[64,8], index: 1, kind: input, shape index: {}]
  %s2 = inlined_call_operand.vmem [shape: f32[64,8], index: 2, kind: input, shape index: {}]
  %s3 = inlined_call_operand.vmem [shape: f32[1,64], index: 3, kind: input, shape index: {}]
  %s4 = inlined_call_operand.hbm [shape: f32[1,1], index: 4, kind: output, shape index: {}]
  %s5 = sld [smem:[#allocation0]]
  $region34: #{tpu_custom_call.1} parent=0
    _
  %s7 = ssub.s32 1, %s5
  %s8 = scalar_select 0, %s7, %s5
  $region1: #{tpu_custom_call.1} parent=0
    #allocation6 [shape = 'u8[512]{0}', space=vmem, size = 0x400, scoped, tag = 'output window, operand 0, single buffered']
    #allocation7 [shape = 's32[1]{0}', space=sflag, size = 0x4, scoped, tag = 'scoped memory for tpu_custom_call.1']
    %9 = vsyncpa [#allocation7], 0
    // Predicated region
    $region2: #{tpu_custom_call.1} parent=1 // pred_check
      _
    $region3: #{tpu_custom_call.1} parent=1 // pred_check_branch
      %11 = sbr.rel (0) target = $region5
    $region4: #{tpu_custom_call.1} parent=1 // pred_region
      _
    $region5: #{tpu_custom_call.1} parent=1 // pred_fallthru
      _
    // Predicated region
    $region6: #{tpu_custom_call.1} parent=1 // pred_check
      _
    $region7: #{tpu_custom_call.1} parent=1 // pred_check_branch
      %13 = sbr.rel (0) target = $region9
    $region8: #{tpu_custom_call.1} parent=1 // pred_region
      _
    $region9: #{tpu_custom_call.1} parent=1 // pred_fallthru
      _
    // Predicated region
    $region10: #{tpu_custom_call.1} parent=1 // pred_check
      _
    $region11: #{tpu_custom_call.1} parent=1 // pred_check_branch
      %15 = sbr.rel (0) target = $region13
    $region12: #{tpu_custom_call.1} parent=1 // pred_region
      _
    $region13: #{tpu_custom_call.1} parent=1 // pred_fallthru
      _
    // Predicated region
    $region14: #{tpu_custom_call.1} parent=1 // pred_check
      _
    $region15: #{tpu_custom_call.1} parent=1 // pred_check_branch
      %17 = sbr.rel (0) target = $region17
    $region16: #{tpu_custom_call.1} parent=1 // pred_region
      _
    $region17: #{tpu_custom_call.1} parent=1 // pred_fallthru
      _
    %p18 = scmp.eq.s32.totalorder 0, 0
    // Predicated region
    $region18: #{tpu_custom_call.1} parent=1 // pred_check
      %p19 = pneg %p18
    $region19: #{tpu_custom_call.1} parent=1 // pred_check_branch
      %21 = sbr.rel (%p19) target = $region21
    $region20: #{tpu_custom_call.1} parent=1 // pred_region
      %vm22 = vcmask 0
      %23 = vst.msk [vmem:[#allocation2] sm:$0x1] %vm22, 0.0
      %24 = vst.msk [vmem:[#allocation3] sm:$0x1] %vm22, 0.0
      %25 = vst.msk [vmem:[#allocation4] sm:$0x1] %vm22, 0.0
      %26 = vst.msk [vmem:[#allocation5] sm:$0x1] %vm22, 0.0
      %27 = vst.msk [vmem:[#allocation6] sm:$0x1] %vm22, 0.0
    $region21: #{tpu_custom_call.1} parent=1 // pred_fallthru
      _
    %v28 = vld [vmem:[%s0] sm:$0xff]
    %v29 = vld [vmem:[%s0 + $0x8] sm:$0xff]
    %v30 = vld [vmem:[%s0 + $0x10] sm:$0xff]
    %v31 = vld [vmem:[%s0 + $0x18] sm:$0xff]
    %v32 = vld [vmem:[%s0 + $0x20] sm:$0xff]
    %v33 = vld [vmem:[%s0 + $0x28] sm:$0xff]
    %v34 = vld [vmem:[%s0 + $0x30] sm:$0xff]
    %v35 = vld [vmem:[%s0 + $0x38] sm:$0xff]
    %v36 = vld [vmem:[%s1] sm:$0xff]
    %v37 = vld [vmem:[%s1 + $0x8] sm:$0xff]
    %v38 = vld [vmem:[%s1 + $0x10] sm:$0xff]
    %v39 = vld [vmem:[%s1 + $0x18] sm:$0xff]
    %v40 = vld [vmem:[%s1 + $0x20] sm:$0xff]
    %v41 = vld [vmem:[%s1 + $0x28] sm:$0xff]
    %v42 = vld [vmem:[%s1 + $0x30] sm:$0xff]
    %v43 = vld [vmem:[%s1 + $0x38] sm:$0xff]
    %v44 = vld [vmem:[%s2] sm:$0xff]
    %v45 = vld [vmem:[%s2 + $0x8] sm:$0xff]
    %v46 = vld [vmem:[%s2 + $0x10] sm:$0xff]
    %v47 = vld [vmem:[%s2 + $0x18] sm:$0xff]
    %v48 = vld [vmem:[%s2 + $0x20] sm:$0xff]
    %v49 = vld [vmem:[%s2 + $0x28] sm:$0xff]
    %v50 = vld [vmem:[%s2 + $0x30] sm:$0xff]
    %v51 = vld [vmem:[%s2 + $0x38] sm:$0xff]
    %v52 = vld [vmem:[%s3] sm:$0x1]
    %v53 = vmul.f32 %v36, %v36
    %v54 = vmul.f32 %v37, %v37
    %v55 = vmul.f32 %v38, %v38
    %v56 = vmul.f32 %v39, %v39
    %v57 = vmul.f32 %v40, %v40
    %v58 = vmul.f32 %v41, %v41
    %v59 = vmul.f32 %v42, %v42
    %v60 = vmul.f32 %v43, %v43
    %vm61 = vcmask 64512
    %v62 = vsel %vm61, %v53, 0.0
    %63 = vadd.xlane.f32.xlu0 %v62
    %v64 = vpop.xlane.xlu0 %63
    %v65 = vsel %vm61, %v54, 0.0
    %66 = vadd.xlane.f32.xlu0 %v65
    %v67 = vpop.xlane.xlu0 %66
    %v68 = vsel %vm61, %v55, 0.0
    %69 = vadd.xlane.f32.xlu0 %v68
    %v70 = vpop.xlane.xlu0 %69
    %v71 = vsel %vm61, %v56, 0.0
    %72 = vadd.xlane.f32.xlu0 %v71
    %v73 = vpop.xlane.xlu0 %72
    %v74 = vsel %vm61, %v57, 0.0
    %75 = vadd.xlane.f32.xlu0 %v74
    %v76 = vpop.xlane.xlu0 %75
    %v77 = vsel %vm61, %v58, 0.0
    %78 = vadd.xlane.f32.xlu0 %v77
    %v79 = vpop.xlane.xlu0 %78
    %v80 = vsel %vm61, %v59, 0.0
    %81 = vadd.xlane.f32.xlu0 %v80
    %v82 = vpop.xlane.xlu0 %81
    %v83 = vsel %vm61, %v60, 0.0
    %84 = vadd.xlane.f32.xlu0 %v83
    %v85 = vpop.xlane.xlu0 %84
    %v87 = vsel %vm61, %v36, 0
    %v90 = vsel %vm61, %v37, 0
    %v93 = vsel %vm61, %v38, 0
    %v96 = vsel %vm61, %v39, 0
    %v99 = vsel %vm61, %v40, 0
    %v102 = vsel %vm61, %v41, 0
    %v105 = vsel %vm61, %v42, 0
    %v108 = vsel %vm61, %v43, 0
    %v111 = vsel %vm61, %v44, 0
    %v114 = vsel %vm61, %v45, 0
    %v117 = vsel %vm61, %v46, 0
    %v120 = vsel %vm61, %v47, 0
    %v123 = vsel %vm61, %v48, 0
    %v126 = vsel %vm61, %v49, 0
    %v129 = vsel %vm61, %v50, 0
    %v132 = vsel %vm61, %v51, 0
    %134 = vmatprep.subr.mxu0 0.0
    %135 = vmatpush1.xpose.msra.mxu0 %v111
    %136 = vmatprep.subr.mxu0 0.0
    %137 = vmatpush1.xpose.msra.mxu0 %v114
    %138 = vmatprep.subr.mxu0 0.0
    %139 = vmatpush1.xpose.msra.mxu0 %v117
    %140 = vmatprep.subr.mxu0 0.0
    %141 = vmatpush1.xpose.msra.mxu0 %v120
    %142 = vmatprep.subr.mxu0 0.0
    %143 = vmatpush1.xpose.msra.mxu0 %v123
    %144 = vmatprep.subr.mxu0 0.0
    %145 = vmatpush1.xpose.msra.mxu0 %v126
    %146 = vmatprep.subr.mxu0 0.0
    %147 = vmatpush1.xpose.msra.mxu0 %v129
    %148 = vmatprep.subr.mxu0 0.0
    %149 = vmatpush1.xpose.msra.mxu0 %v132
    %150 = vmatprep.subr.mxu0 0.0
    %151 = vmatpush1.xpose.msra.mxu0 0.0
    %152 = vmatprep.subr.mxu0 0.0
    %153 = vmatpush1.xpose.msra.mxu0 0.0
    %154 = vmatprep.subr.mxu0 0.0
    %155 = vmatpush1.xpose.msra.mxu0 0.0
    %156 = vmatprep.subr.mxu0 0.0
    %157 = vmatpush1.xpose.msra.mxu0 0.0
    %158 = vmatprep.subr.mxu0 0.0
    %159 = vmatpush1.xpose.msra.mxu0 0.0
    %160 = vmatprep.subr.mxu0 0.0
    %161 = vmatpush1.xpose.msra.mxu0 0.0
    %162 = vmatprep.subr.mxu0 0.0
    %163 = vmatpush1.xpose.msra.mxu0 0.0
    %164 = vmatprep.subr.mxu0 0.0
    %165 = vmatpush1.xpose.msra.mxu0 0.0
    %166 = vmatprep.subr.mxu0 0.0
    %167 = vmatpush1.xpose.msra.mxu0 0.0
    %168 = vmatprep.subr.mxu0 0.0
    %169 = vmatpush1.xpose.msra.mxu0 0.0
    %170 = vmatprep.subr.mxu0 0.0
    %171 = vmatpush1.xpose.msra.mxu0 0.0
    %172 = vmatprep.subr.mxu0 0.0
    %173 = vmatpush1.xpose.msra.mxu0 0.0
    %174 = vmatprep.subr.mxu0 0.0
    %175 = vmatpush1.xpose.msra.mxu0 0.0
    %176 = vmatprep.subr.mxu0 0.0
    %177 = vmatpush1.xpose.msra.mxu0 0.0
    %178 = vmatprep.subr.mxu0 0.0
    %179 = vmatpush1.xpose.msra.mxu0 0.0
    %180 = vmatprep.subr.mxu0 0.0
    %181 = vmatpush1.xpose.msra.mxu0 0.0
    %182 = vmatprep.subr.mxu0 0.0
    %183 = vmatpush1.xpose.msra.mxu0 0.0
    %184 = vmatprep.subr.mxu0 0.0
    %185 = vmatpush1.xpose.msra.mxu0 0.0
    %186 = vmatprep.subr.mxu0 0.0
    %187 = vmatpush1.xpose.msra.mxu0 0.0
    %188 = vmatprep.subr.mxu0 0.0
    %189 = vmatpush1.xpose.msra.mxu0 0.0
    %190 = vmatprep.subr.mxu0 0.0
    %191 = vmatpush1.xpose.msra.mxu0 0.0
    %192 = vmatprep.subr.mxu0 0.0
    %193 = vmatpush1.xpose.msra.mxu0 0.0
    %194 = vmatprep.subr.mxu0 0.0
    %195 = vmatpush1.xpose.msra.mxu0 0.0
    %196 = vmatprep.subr.mxu0 0.0
    %197 = vmatpush1.xpose.msra.mxu0 0.0
    %198 = vmatprep.mubr.f32.mxu0 0.0
    %199 = vmatmul.mubr.f32.gmra.mrb[0].mxu0 %v87
    %v200 = vpop.f32.mrb[0].mxu0
    %v201 = vadd.f32 0.0, %v200
    %v202 = vpop.f32.mrb[0].mxu0
    %203 = vmatprep.mubr.f32.mxu0 0.0
    %204 = vmatmul.mubr.f32.gmra.mrb[0].mxu0 %v90
    %v205 = vpop.f32.mrb[0].mxu0
    %v206 = vadd.f32 0.0, %v205
    %v207 = vpop.f32.mrb[0].mxu0
    %208 = vmatprep.mubr.f32.mxu0 0.0
    %209 = vmatmul.mubr.f32.gmra.mrb[0].mxu0 %v93
    %v210 = vpop.f32.mrb[0].mxu0
    %v211 = vadd.f32 0.0, %v210
    %v212 = vpop.f32.mrb[0].mxu0
    %213 = vmatprep.mubr.f32.mxu0 0.0
    %214 = vmatmul.mubr.f32.gmra.mrb[0].mxu0 %v96
    %v215 = vpop.f32.mrb[0].mxu0
    %v216 = vadd.f32 0.0, %v215
    %v217 = vpop.f32.mrb[0].mxu0
    %218 = vmatprep.mubr.f32.mxu0 0.0
    %219 = vmatmul.mubr.f32.gmra.mrb[0].mxu0 %v99
    %v220 = vpop.f32.mrb[0].mxu0
    %v221 = vadd.f32 0.0, %v220
    %v222 = vpop.f32.mrb[0].mxu0
    %223 = vmatprep.mubr.f32.mxu0 0.0
    %224 = vmatmul.mubr.f32.gmra.mrb[0].mxu0 %v102
    %v225 = vpop.f32.mrb[0].mxu0
    %v226 = vadd.f32 0.0, %v225
    %v227 = vpop.f32.mrb[0].mxu0
    %228 = vmatprep.mubr.f32.mxu0 0.0
    %229 = vmatmul.mubr.f32.gmra.mrb[0].mxu0 %v105
    %v230 = vpop.f32.mrb[0].mxu0
    %v231 = vadd.f32 0.0, %v230
    %v232 = vpop.f32.mrb[0].mxu0
    %233 = vmatprep.mubr.f32.mxu0 0.0
    %234 = vmatmul.mubr.f32.gmra.mrb[0].mxu0 %v108
    %v235 = vpop.f32.mrb[0].mxu0
    %v236 = vadd.f32 0.0, %v235
    %v237 = vpop.f32.mrb[0].mxu0
    %238 = vdwg.mxu0
    %v240 = vlaneseq
    %v241 = vshrl.u32 %v240, 7
    %v242 = vsub.s32 0, %v241
    %v243 = vrot.slane %v52, %v242
    %v245 = vadd.f32 %v64, %v243
    %v246 = vadd.f32 %v67, %v243
    %v247 = vadd.f32 %v70, %v243
    %v248 = vadd.f32 %v73, %v243
    %v249 = vadd.f32 %v76, %v243
    %v250 = vadd.f32 %v79, %v243
    %v251 = vadd.f32 %v82, %v243
    %v252 = vadd.f32 %v85, %v243
    %v253 = vmul.f32 %v201, 2.0
    %v254 = vmul.f32 %v206, 2.0
    %v255 = vmul.f32 %v211, 2.0
    %v256 = vmul.f32 %v216, 2.0
    %v257 = vmul.f32 %v221, 2.0
    %v258 = vmul.f32 %v226, 2.0
    %v259 = vmul.f32 %v231, 2.0
    %v260 = vmul.f32 %v236, 2.0
    %v261 = vsub.f32 %v245, %v253
    %v262 = vsub.f32 %v246, %v254
    %v263 = vsub.f32 %v247, %v255
    %v264 = vsub.f32 %v248, %v256
    %v265 = vsub.f32 %v249, %v257
    %v266 = vsub.f32 %v250, %v258
    %v267 = vsub.f32 %v251, %v259
    %v268 = vsub.f32 %v252, %v260
    %v269 = vmax.f32 %v261, 0.0
    %v270 = vmax.f32 %v262, 0.0
    %v271 = vmax.f32 %v263, 0.0
    %v272 = vmax.f32 %v264, 0.0
    %v273 = vmax.f32 %v265, 0.0
    %v274 = vmax.f32 %v266, 0.0
    %v275 = vmax.f32 %v267, 0.0
    %v276 = vmax.f32 %v268, 0.0
    %v277 = vadd.f32 %v269, 1.0
    %v278 = vadd.f32 %v270, 1.0
    %v279 = vadd.f32 %v271, 1.0
    %v280 = vadd.f32 %v272, 1.0
    %v281 = vadd.f32 %v273, 1.0
    %v282 = vadd.f32 %v274, 1.0
    %v283 = vadd.f32 %v275, 1.0
    %v284 = vadd.f32 %v276, 1.0
    %v285 = vrcp.pop %v277
    %v286 = vmul.f32 1.0, %v285
    %v287 = vrcp.pop %v278
    %v288 = vmul.f32 1.0, %v287
    %v289 = vrcp.pop %v279
    %v290 = vmul.f32 1.0, %v289
    %v291 = vrcp.pop %v280
    %v292 = vmul.f32 1.0, %v291
    %v293 = vrcp.pop %v281
    %v294 = vmul.f32 1.0, %v293
    %v295 = vrcp.pop %v282
    %v296 = vmul.f32 1.0, %v295
    %v297 = vrcp.pop %v283
    %v298 = vmul.f32 1.0, %v297
    %v299 = vrcp.pop %v284
    %v300 = vmul.f32 1.0, %v299
    %v301 = vld [vmem:[#allocation2] sm:$0x1]
    %vm302 = vcmask 523264
    %v303 = vsel %vm302, %v286, 0.0
    %v304 = vsel %vm302, %v288, 0.0
    %v305 = vadd.f32 %v303, %v304
    %v306 = vsel %vm302, %v290, 0.0
    %v307 = vadd.f32 %v305, %v306
    %v308 = vsel %vm302, %v292, 0.0
    %v309 = vadd.f32 %v307, %v308
    %v310 = vsel %vm302, %v294, 0.0
    %v311 = vadd.f32 %v309, %v310
    %v312 = vsel %vm302, %v296, 0.0
    %v313 = vadd.f32 %v311, %v312
    %v314 = vsel %vm302, %v298, 0.0
    %v315 = vadd.f32 %v313, %v314
    %v316 = vsel %vm302, %v300, 0.0
    %v317 = vadd.f32 %v315, %v316
    %318 = vadd.xlane.f32.xlu0 %v317
    %v319 = vpop.xlane.xlu0 %318
    %v320 = vrot.slane %v319, 4
    %v321 = vadd.f32 %v319, %v320
    %v322 = vrot.slane %v321, 2
    %v323 = vadd.f32 %v321, %v322
    %v324 = vrot.slane %v323, 1
    %v325 = vadd.f32 %v323, %v324
    %s326 = vtos %v325
    %s327 = ssub.f32 %s326, 64.0
    %v328 = vstv %s327
    %v329 = vadd.f32 %v301, %v328
    %vm330 = vcmask 0
    %331 = vst.msk [vmem:[#allocation2] sm:$0x1] %vm330, %v329
    %v332 = vadd.f32 %v28, 1e-15
    %v333 = vadd.f32 %v29, 1e-15
    %v334 = vadd.f32 %v30, 1e-15
    %v335 = vadd.f32 %v31, 1e-15
    %v336 = vadd.f32 %v32, 1e-15
    %v337 = vadd.f32 %v33, 1e-15
    %v338 = vadd.f32 %v34, 1e-15
    %v339 = vadd.f32 %v35, 1e-15
    %v340 = vmul.f32 %v332, %v277
    %v341 = vmul.f32 %v333, %v278
    %v342 = vmul.f32 %v334, %v279
    %v343 = vmul.f32 %v335, %v280
    %v344 = vmul.f32 %v336, %v281
    %v345 = vmul.f32 %v337, %v282
    %v346 = vmul.f32 %v338, %v283
    %v347 = vmul.f32 %v339, %v284
    %v348 = vlog2.pop %v340
    %v349 = vmul.f32 %v348, 0.6931472
    %v350 = vlog2.pop %v341
    %v351 = vmul.f32 %v350, 0.6931472
    %v352 = vlog2.pop %v342
    %v353 = vmul.f32 %v352, 0.6931472
    %v354 = vlog2.pop %v343
    %v355 = vmul.f32 %v354, 0.6931472
    %v356 = vlog2.pop %v344
    %v357 = vmul.f32 %v356, 0.6931472
    %v358 = vlog2.pop %v345
    %v359 = vmul.f32 %v358, 0.6931472
    %v360 = vlog2.pop %v346
    %v361 = vmul.f32 %v360, 0.6931472
    %v362 = vlog2.pop %v347
    %v363 = vmul.f32 %v362, 0.6931472
    %v364 = vld [vmem:[#allocation3] sm:$0x1]
    %v365 = vmul.f32 %v28, %v349
    %v366 = vmul.f32 %v29, %v351
    %v367 = vmul.f32 %v30, %v353
    %v368 = vmul.f32 %v31, %v355
    %v369 = vmul.f32 %v32, %v357
    %v370 = vmul.f32 %v33, %v359
    %v371 = vmul.f32 %v34, %v361
    %v372 = vmul.f32 %v35, %v363
    %v373 = vsel %vm302, %v365, 0.0
    %v374 = vsel %vm302, %v366, 0.0
    %v375 = vadd.f32 %v373, %v374
    %v376 = vsel %vm302, %v367, 0.0
    %v377 = vadd.f32 %v375, %v376
    %v378 = vsel %vm302, %v368, 0.0
    %v379 = vadd.f32 %v377, %v378
    %v380 = vsel %vm302, %v369, 0.0
    %v381 = vadd.f32 %v379, %v380
    %v382 = vsel %vm302, %v370, 0.0
    %v383 = vadd.f32 %v381, %v382
    %v384 = vsel %vm302, %v371, 0.0
    %v385 = vadd.f32 %v383, %v384
    %v386 = vsel %vm302, %v372, 0.0
    %v387 = vadd.f32 %v385, %v386
    %388 = vadd.xlane.f32.xlu0 %v387
    %v389 = vpop.xlane.xlu0 %388
    %v390 = vrot.slane %v389, 4
    %v391 = vadd.f32 %v389, %v390
    %v392 = vrot.slane %v391, 2
    %v393 = vadd.f32 %v391, %v392
    %v394 = vrot.slane %v393, 1
    %v395 = vadd.f32 %v393, %v394
    %s396 = vtos %v395
    %v397 = vstv %s396
    %v398 = vadd.f32 %v364, %v397
    %399 = vst.msk [vmem:[#allocation3] sm:$0x1] %vm330, %v398
    %v400 = vld [vmem:[#allocation4] sm:$0x1]
    %v401 = vsel %vm302, %v28, 0.0
    %v402 = vsel %vm302, %v29, 0.0
    %v403 = vadd.f32 %v401, %v402
    %v404 = vsel %vm302, %v30, 0.0
    %v405 = vadd.f32 %v403, %v404
    %v406 = vsel %vm302, %v31, 0.0
    %v407 = vadd.f32 %v405, %v406
    %v408 = vsel %vm302, %v32, 0.0
    %v409 = vadd.f32 %v407, %v408
    %v410 = vsel %vm302, %v33, 0.0
    %v411 = vadd.f32 %v409, %v410
    %v412 = vsel %vm302, %v34, 0.0
    %v413 = vadd.f32 %v411, %v412
    %v414 = vsel %vm302, %v35, 0.0
    %v415 = vadd.f32 %v413, %v414
    %416 = vadd.xlane.f32.xlu0 %v415
    %v417 = vpop.xlane.xlu0 %416
    %v418 = vrot.slane %v417, 4
    %v419 = vadd.f32 %v417, %v418
    %v420 = vrot.slane %v419, 2
    %v421 = vadd.f32 %v419, %v420
    %v422 = vrot.slane %v421, 1
    %v423 = vadd.f32 %v421, %v422
    %s424 = vtos %v423
    %v425 = vstv %s424
    %v426 = vadd.f32 %v400, %v425
    %427 = vst.msk [vmem:[#allocation4] sm:$0x1] %vm330, %v426
    // Predicated region
    $region22: #{tpu_custom_call.1} parent=1 // pred_check
      %p428 = pneg %p18
    $region23: #{tpu_custom_call.1} parent=1 // pred_check_branch
      %430 = sbr.rel (%p428) target = $region25
    $region24: #{tpu_custom_call.1} parent=1 // pred_region
      %v431 = vld [vmem:[#allocation2] sm:$0x1]
      %v432 = vld [vmem:[#allocation3] sm:$0x1]
      %v433 = vlog2.pop %v431
      %v434 = vmul.f32 %v433, 0.6931472
      %v435 = vld [vmem:[#allocation4] sm:$0x1]
      %v436 = vmul.f32 %v434, %v435
      %v437 = vadd.f32 %v432, %v436
      %v438 = vrcp.pop 4096.0
      %v439 = vmul.f32 %v437, %v438
      %440 = vst.msk [vmem:[#allocation6] sm:$0x1] %vm330, %v439
    $region25: #{tpu_custom_call.1} parent=1 // pred_fallthru
      _
    // Predicated region
    $region26: #{tpu_custom_call.1} parent=1 // pred_check
      _
    $region27: #{tpu_custom_call.1} parent=1 // pred_check_branch
      %442 = sbr.rel (0) target = $region29
    $region28: #{tpu_custom_call.1} parent=1 // pred_region
      %s444 = ssub.s32 16, 16
      %445 = vsyncadd [#allocation7], %s444
      %s447 = sshll.u32 [#allocation6], 4
      %s448 = int_to_ptr.vmem [resolvable:$true] %s447
      %450 = dma.vmem_to_hbm [thread:$0]  %s448, 16, %s4, [#allocation7]
    $region29: #{tpu_custom_call.1} parent=1 // pred_fallthru
      _
    // Predicated region
    $region30: #{tpu_custom_call.1} parent=1 // pred_check
      _
    $region31: #{tpu_custom_call.1} parent=1 // pred_check_branch
      %452 = sbr.rel (0) target = $region33
    $region32: #{tpu_custom_call.1} parent=1 // pred_region
      %453 = dma.done [#allocation7], 16
    $region33: #{tpu_custom_call.1} parent=1 // pred_fallthru
      _
    %454 = vsyncpa [#allocation7], 1

</llo_original>
